<compile_context>
chip_gen: v5e
topology: v5e:2x2
jax: 0.10.0
libtpu: 0.0.40
codegen_flags: <defaults>
</compile_context>

<pallas_src>
import jax
import jax.numpy as jnp
from jax.experimental import pallas as pl
from jax.experimental.pallas import tpu as pltpu


def _dlw_kernel(losses_ref, log_vars_ref, out_ref):
    # losses_ref, log_vars_ref: (1, N) f32 in VMEM; out_ref: (1, 1) f32 in SMEM.
    ls = losses_ref[...]
    lv = log_vars_ref[...]
    # Fused elementwise (VPU + EUP), then a single XLU cross-lane reduce.
    out_ref[0, 0] = 0.5 * jnp.sum(jnp.exp(-lv) * ls + lv)


def _dlw_masked_kernel(losses_ref, log_vars_ref, mask_ref, out_ref):
    # mask_ref: (1, N) f32, 1.0 if branch present else 0.0.
    ls = losses_ref[...]
    lv = log_vars_ref[...]
    m = mask_ref[...]
    term = jnp.exp(-lv) * ls + lv
    # where (not multiply) so NaN/Inf in absent slots is suppressed, matching
    # the PyTorch `loss is None` skip.
    out_ref[0, 0] = 0.5 * jnp.sum(jnp.where(m > 0.0, term, 0.0))


def dynamic_loss_weights(losses: jnp.ndarray,
                         log_vars: jnp.ndarray,
                         mask: jnp.ndarray | None = None) -> jnp.ndarray:
    """losses, log_vars: shape (num_branches,) f32. Optional mask (1.0 = branch
    present, 0.0 = absent) mirrors the PyTorch `loss is None` skip.
    Returns scalar f32."""
    n = losses.shape[-1]
    ls = losses.reshape(1, n).astype(jnp.float32)
    lv = log_vars.reshape(1, n).astype(jnp.float32)

    vmem = pl.BlockSpec(memory_space=pltpu.MemorySpace.VMEM)
    smem_out = pl.BlockSpec(memory_space=pltpu.MemorySpace.SMEM)

    if mask is None:
        out = pl.pallas_call(
            _dlw_kernel,
            out_shape=jax.ShapeDtypeStruct((1, 1), jnp.float32),
            in_specs=[vmem, vmem],
            out_specs=smem_out,
            cost_estimate=pl.CostEstimate(
                flops=4 * n, transcendentals=n, bytes_accessed=8 * n + 4),
        )(ls, lv)
    else:
        mk = mask.reshape(1, n).astype(jnp.float32)
        out = pl.pallas_call(
            _dlw_masked_kernel,
            out_shape=jax.ShapeDtypeStruct((1, 1), jnp.float32),
            in_specs=[vmem, vmem, vmem],
            out_specs=smem_out,
            cost_estimate=pl.CostEstimate(
                flops=6 * n, transcendentals=n, bytes_accessed=12 * n + 4),
        )(ls, lv, mk)
    return out[0, 0]


class DynamicLossWeightsPallas:
    """Mirror of the PyTorch module; parameters initialized deterministically."""

    def __init__(self, num_branches: int = 3, init_weights=None):
        self.num_branches = num_branches
        if init_weights is None:
            init_weights = [-1.85, -1.05, -1.0][:num_branches]
        self.log_vars = jnp.asarray(init_weights, dtype=jnp.float32)

    def __call__(self, losses: jnp.ndarray, mask: jnp.ndarray | None = None) -> jnp.ndarray:
        assert losses.shape[0] == self.num_branches
        return dynamic_loss_weights(losses, self.log_vars, mask)


if __name__ == "__main__":
    key = jax.random.PRNGKey(0)
    num_branches = 3

    # Synthetic per-branch scalar losses (e.g. outputs of three training heads).
    losses = jax.random.uniform(key, (num_branches,), dtype=jnp.float32) * 2.0

    module = DynamicLossWeightsPallas(num_branches=num_branches)

    # 1) All branches present (fast path, no mask input).
    out = jax.block_until_ready(module(losses))
    ref = 0.5 * (jnp.sum(jnp.exp(-module.log_vars) * losses) + jnp.sum(module.log_vars))
    assert jnp.allclose(out, ref, rtol=1e-6, atol=1e-6), (out, ref)

    # 2) Branch 1 absent (PyTorch `loss is None` skip), expressed as a mask.
    #    Put a NaN in the absent slot to verify the where-based masking really
    #    suppresses it (multiplicative masking would propagate NaN).
    mask = jnp.array([1.0, 0.0, 1.0], dtype=jnp.float32)
    losses_with_nan = losses.at[1].set(jnp.nan)
    out_masked = jax.block_until_ready(module(losses_with_nan, mask))
    term_ref = jnp.exp(-module.log_vars) * losses_with_nan + module.log_vars
    ref_masked = 0.5 * jnp.sum(jnp.where(mask > 0.0, term_ref, 0.0))
    assert jnp.isfinite(out_masked), out_masked
    assert jnp.allclose(out_masked, ref_masked, rtol=1e-6, atol=1e-6), (out_masked, ref_masked)

    print("KERNEL_OK")
</pallas_src>

<mosaic_0001>
module attributes {stable_mosaic.version = 11 : i64} {
  func.func @_dlw_kernel(%arg0: memref<1x3xf32, #tpu.memory_space<vmem>>, %arg1: memref<1x3xf32, #tpu.memory_space<vmem>>, %arg2: memref<1x1xf32, #tpu.memory_space<smem>>) attributes {dimension_semantics = [], scalar_prefetch = 0 : i64, scratch_operands = 0 : i64, tpu.core_type = #tpu.core_type<tc>} {
    %c0 = arith.constant 0 : index
    %c0_0 = arith.constant 0 : index
    %0 = vector.load %arg0[%c0, %c0_0] : memref<1x3xf32, #tpu.memory_space<vmem>>, vector<1x3xf32>
    %c0_1 = arith.constant 0 : index
    %c0_2 = arith.constant 0 : index
    %1 = vector.load %arg1[%c0_1, %c0_2] : memref<1x3xf32, #tpu.memory_space<vmem>>, vector<1x3xf32>
    %cst = arith.constant 0.000000e+00 : f32
    %2 = vector.broadcast %cst : f32 to vector<1x3xf32>
    %3 = arith.subf %2, %1 : vector<1x3xf32>
    %4 = math.exp %3 : vector<1x3xf32>
    %5 = arith.mulf %4, %0 : vector<1x3xf32>
    %6 = arith.addf %5, %1 : vector<1x3xf32>
    %7 = vector.shape_cast %6 : vector<1x3xf32> to vector<1x1x3xf32>
    %cst_3 = arith.constant dense<0.000000e+00> : vector<1xf32>
    %8 = vector.multi_reduction <add>, %7, %cst_3 [1, 2] : vector<1x1x3xf32> to vector<1xf32>
    %9 = vector.shape_cast %8 : vector<1xf32> to vector<1x1x1xf32>
    %10 = vector.extract %9[0, 0, 0] : f32 from vector<1x1x1xf32>
    %cst_4 = arith.constant 5.000000e-01 : f32
    %11 = arith.mulf %cst_4, %10 : f32
    %c0_5 = arith.constant 0 : index
    %c0_6 = arith.constant 0 : index
    %12 = memref.load %arg2[%c0_5, %c0_6] : memref<1x1xf32, #tpu.memory_space<smem>>
    memref.store %11, %arg2[%c0_5, %c0_6] : memref<1x1xf32, #tpu.memory_space<smem>>
    return
  }
}

</mosaic_0001>

<llo_original>
// kernel: tpu_custom_call.1
$region0: #{tpu_custom_call.1}
  #allocation0 [shape = 'u32[]', space=smem, size = 0x4, offset = 0x4, fixed_abs, tag = 'smem constant byte address 0x4 - core index']
  #allocation1 [shape = 'u32[72,128]{1,0:T(1,128)}', space=vmem, size = 0x9000, scoped, tag = 'internal scratch']
  %s0 = inlined_call_operand.hbm [shape: f32[1,3], index: 0, kind: input, shape index: {}]
  %s1 = inlined_call_operand.hbm [shape: f32[1,3], index: 1, kind: input, shape index: {}]
  %s2 = inlined_call_operand.hbm [shape: f32[1,1], index: 2, kind: output, shape index: {}]
  %s3 = sld [smem:[#allocation0]]
  $region26: #{tpu_custom_call.1} parent=0
    _
  %s5 = ssub.s32 1, %s3
  %s6 = scalar_select 0, %s5, %s3
  $region1: #{tpu_custom_call.1} parent=0
    #allocation2 [shape = 'u8[512]{0}', space=vmem, size = 0x400, scoped, tag = 'input window, operand 0, single buffered']
    #allocation3 [shape = 's32[1]{0}', space=sflag, size = 0x4, scoped, tag = 'scoped memory for tpu_custom_call.1']
    #allocation4 [shape = 's32[1]{0}', space=sflag, size = 0x4, scoped, tag = 'scoped memory for tpu_custom_call.1']
    #allocation5 [shape = 'u8[512]{0}', space=vmem, size = 0x400, scoped, tag = 'input window, operand 1, single buffered']
    #allocation6 [shape = 's32[1]{0}', space=sflag, size = 0x4, scoped, tag = 'scoped memory for tpu_custom_call.1']
    #allocation7 [shape = 'u8[512]{0}', space=smem, size = 0x200, scoped, tag = 'output window, operand 0, single buffered']
    %7 = vsyncpa [#allocation3], 0
    %8 = vsyncpa [#allocation6], 0
    %9 = vsyncpa [#allocation4], 0
    // Predicated region
    $region2: #{tpu_custom_call.1} parent=1 // pred_check
      _
    $region3: #{tpu_custom_call.1} parent=1 // pred_check_branch
      %11 = sbr.rel (0) target = $region5
    $region4: #{tpu_custom_call.1} parent=1 // pred_region
      %13 = vsyncadd [#allocation3], 0
      %s15 = sshll.u32 %s0, 4
      %s16 = int_to_ptr.hbm [resolvable:$true] %s15
      %s17 = sshll.u32 [#allocation2], 4
      %s18 = int_to_ptr.vmem [resolvable:$true] %s17
      %20 = dma.hbm_to_vmem [thread:$0]  %s16, 16, %s18, [#allocation3]
    $region5: #{tpu_custom_call.1} parent=1 // pred_fallthru
      _
    // Predicated region
    $region6: #{tpu_custom_call.1} parent=1 // pred_check
      _
    $region7: #{tpu_custom_call.1} parent=1 // pred_check_branch
      %22 = sbr.rel (0) target = $region9
    $region8: #{tpu_custom_call.1} parent=1 // pred_region
      %24 = vsyncadd [#allocation6], 0
      %s26 = sshll.u32 %s1, 4
      %s27 = int_to_ptr.hbm [resolvable:$true] %s26
      %s28 = sshll.u32 [#allocation5], 4
      %s29 = int_to_ptr.vmem [resolvable:$true] %s28
      %31 = dma.hbm_to_vmem [thread:$0]  %s27, 16, %s29, [#allocation6]
    $region9: #{tpu_custom_call.1} parent=1 // pred_fallthru
      _
    // Predicated region
    $region10: #{tpu_custom_call.1} parent=1 // pred_check
      _
    $region11: #{tpu_custom_call.1} parent=1 // pred_check_branch
      %33 = sbr.rel (0) target = $region13
    $region12: #{tpu_custom_call.1} parent=1 // pred_region
      %35 = dma.done [#allocation3], 16
    $region13: #{tpu_custom_call.1} parent=1 // pred_fallthru
      _
    // Predicated region
    $region14: #{tpu_custom_call.1} parent=1 // pred_check
      _
    $region15: #{tpu_custom_call.1} parent=1 // pred_check_branch
      %37 = sbr.rel (0) target = $region17
    $region16: #{tpu_custom_call.1} parent=1 // pred_region
      %39 = dma.done [#allocation6], 16
    $region17: #{tpu_custom_call.1} parent=1 // pred_fallthru
      _
    %v40 = vld [vmem:[#allocation2] sm:$0x1]
    %v41 = vld [vmem:[#allocation5] sm:$0x1]
    %v42 = vsub.f32 0.0, %v41
    %v43 = vmul.f32 %v42, 1.442695
    %v44 = vpow.pop %v43
    %v45 = vmul.f32 %v44, %v40
    %v46 = vadd.f32 %v45, %v41
    %vm47 = vcmask 16384
    %v48 = vsel %vm47, %v46, 0.0
    %49 = vadd.xlane.f32.xlu0 %v48
    %v50 = vpop.xlane.xlu0 %49
    %v51 = vrot.slane %v50, 4
    %v52 = vadd.f32 %v50, %v51
    %v53 = vrot.slane %v52, 2
    %v54 = vadd.f32 %v52, %v53
    %v55 = vrot.slane %v54, 1
    %v56 = vadd.f32 %v54, %v55
    %s57 = vtos %v56
    %s58 = smul.f32 %s57, 0.5
    %s59 = scalar_lea.smem [#allocation7], 0
    %60 = sst [smem:[%s59]] %s58
    // Predicated region
    $region18: #{tpu_custom_call.1} parent=1 // pred_check
      _
    $region19: #{tpu_custom_call.1} parent=1 // pred_check_branch
      %62 = sbr.rel (0) target = $region21
    $region20: #{tpu_custom_call.1} parent=1 // pred_region
      %64 = vsyncadd [#allocation4], 0
      %s66 = sshll.u32 %s2, 4
      %s67 = int_to_ptr.hbm [resolvable:$true] %s66
      %69 = dma.smem_to_hbm [#allocation7], 16, %s67, [#allocation4]
    $region21: #{tpu_custom_call.1} parent=1 // pred_fallthru
      _
    // Predicated region
    $region22: #{tpu_custom_call.1} parent=1 // pred_check
      _
    $region23: #{tpu_custom_call.1} parent=1 // pred_check_branch
      %71 = sbr.rel (0) target = $region25
    $region24: #{tpu_custom_call.1} parent=1 // pred_region
      %73 = dma.done [#allocation4], 16
    $region25: #{tpu_custom_call.1} parent=1 // pred_fallthru
      _
    %74 = sfence
    %75 = vsyncpa [#allocation3], 1
    %76 = vsyncpa [#allocation6], 1
    %77 = vsyncpa [#allocation4], 1

</llo_original>
